<compile_context>
chip_gen: v6e
topology: v6e:2x2x1
jax: 0.10.0
libtpu: 0.0.40
codegen_flags: <defaults>
</compile_context>

<pallas_src>
import jax
import jax.numpy as jnp
from jax.experimental import pallas as pl
from jax.experimental.pallas import tpu as pltpu
from jax.scipy.special import logsumexp


def _clip_descriptor_kernel(scal_ref, img_ref, desc_ref, text_ref, out_ref,
                            m_v_ref, l_v_ref, m_s_ref, l_s_ref, acc_ref):
    # scal_ref : SMEM [3]     = (t, w_vision, w_scene)
    # img_ref  : VMEM [n, d]  resident across the grid (constant index map)
    # desc_ref : VMEM [n, d]  resident across the grid (constant index map)
    # text_ref : VMEM [tk, d] text-row tile k
    # out_ref  : VMEM [1, 1]  scalar loss, written on the last step
    # m_*/l_*  : VMEM [n, 1]  running row max / row sum (online logsumexp)
    # acc_ref  : VMEM [1, 1]  running column-lse / diag contribution
    k = pl.program_id(0)
    n = img_ref.shape[0]
    tk = text_ref.shape[0]

    t = scal_ref[0]
    w_v = scal_ref[1]
    w_s = scal_ref[2]
    inv_t = 1.0 / t
    inv_n = 1.0 / n  # static python constant

    @pl.when(k == 0)
    def _():
        m_v_ref[...] = jnp.full(m_v_ref.shape, -jnp.inf, m_v_ref.dtype)
        m_s_ref[...] = jnp.full(m_s_ref.shape, -jnp.inf, m_s_ref.dtype)
        l_v_ref[...] = jnp.zeros(l_v_ref.shape, l_v_ref.dtype)
        l_s_ref[...] = jnp.zeros(l_s_ref.shape, l_s_ref.dtype)
        acc_ref[...] = jnp.zeros(acc_ref.shape, acc_ref.dtype)

    txt = text_ref[...]                                  # [tk, d]
    img = img_ref[...]                                   # [n, d]
    desc = desc_ref[...]                                 # [n, d]

    # Contraction over the last dim of both operands ('nt' form): the MXU is
    # fed straight from the lane-dense [rows, d] layouts — no transpose.
    dn = (((1,), (1,)), ((), ()))
    sim_v = jax.lax.dot_general(
        img, txt, dn, preferred_element_type=jnp.float32) * inv_t   # [n, tk]
    sim_s = jax.lax.dot_general(
        desc, txt, dn, preferred_element_type=jnp.float32) * inv_t  # [n, tk]

    # ---- online row-direction logsumexp (flash-style) ----------------------
    def row_update(m_ref, l_ref, s):
        m_new = jnp.maximum(m_ref[...], jnp.max(s, axis=-1, keepdims=True))
        l_ref[...] = (l_ref[...] * jnp.exp(m_ref[...] - m_new)
                      + jnp.sum(jnp.exp(s - m_new), axis=-1, keepdims=True))
        m_ref[...] = m_new

    row_update(m_v_ref, l_v_ref, sim_v)
    row_update(m_s_ref, l_s_ref, sim_s)

    # ---- exact column-direction logsumexp for this tile (all rows present) --
    def col_lse(s):
        cm = jnp.max(s, axis=0, keepdims=True)
        return cm + jnp.log(jnp.sum(jnp.exp(s - cm), axis=0, keepdims=True))

    sum_col_v = jnp.sum(col_lse(sim_v), axis=-1, keepdims=True)      # [1, 1]
    sum_col_s = jnp.sum(col_lse(sim_s), axis=-1, keepdims=True)      # [1, 1]

    # ---- diagonal for the columns of this tile, on the VPU in f32 ----------
    off = pl.multiple_of(k * tk, tk)                      # sublane-aligned
    img_diag = img_ref[pl.ds(off, tk), :].astype(jnp.float32)        # [tk, d]
    desc_diag = desc_ref[pl.ds(off, tk), :].astype(jnp.float32)
    txt_f32 = txt.astype(jnp.float32)
    sum_diag_v = jnp.sum(jnp.sum(img_diag * txt_f32, axis=-1, keepdims=True),
                         axis=0, keepdims=True) * inv_t              # [1, 1]
    sum_diag_s = jnp.sum(jnp.sum(desc_diag * txt_f32, axis=-1, keepdims=True),
                         axis=0, keepdims=True) * inv_t              # [1, 1]

    acc_ref[...] += (w_v * (0.5 * sum_col_v - sum_diag_v)
                     + w_s * (0.5 * sum_col_s - sum_diag_s)) * inv_n

    # ---- finalize: add the row-direction term and emit the loss ------------
    @pl.when(k == pl.num_programs(0) - 1)
    def _():
        lse_row_v = m_v_ref[...] + jnp.log(l_v_ref[...])             # [n, 1]
        lse_row_s = m_s_ref[...] + jnp.log(l_s_ref[...])
        sum_row_v = jnp.sum(lse_row_v, axis=0, keepdims=True)        # [1, 1]
        sum_row_s = jnp.sum(lse_row_s, axis=0, keepdims=True)
        out_ref[...] = acc_ref[...] + (0.5 * w_v * sum_row_v
                                       + 0.5 * w_s * sum_row_s) * inv_n


def _pick_col_tile(n, target):
    if n <= target:
        return n
    for cand in (target, 256, 128, 64, 32, 16, 8):
        if cand <= n and n % cand == 0:
            return cand
    return n  # fall back to a single column tile


def clip_descriptor_loss(norm_img_feats, norm_desc_feats, norm_text_feats,
                         temperature, lambda_s, *, features="both",
                         col_tile=128, matmul_in_bf16=False):
    """Pallas TPU implementation of CLIPDescriptorModel.forward.

    norm_img_feats / norm_desc_feats / norm_text_feats: [n, d] L2-normalized.
    """
    n, d = norm_text_feats.shape
    if norm_img_feats.shape != (n, d) or norm_desc_feats.shape != (n, d):
        raise ValueError("img/desc/text feature shapes must all be [n, d]")
    # Alignment contract so every in-kernel row slice is a free aligned view.
    if n % 8 != 0:
        raise ValueError(f"n={n} must be a multiple of 8 (pad the batch)")
    if d % 128 != 0:
        raise ValueError(f"d={d} must be a multiple of 128")

    if features == "both":
        w_v, w_s = lambda_s, 1.0
    elif features == "img":
        w_v, w_s = 1.0, 0.0
    elif features == "text":
        w_v, w_s = 0.0, 1.0
    else:
        raise ValueError("[!] not implement error")  # mirrors the torch module

    feat_dtype = jnp.bfloat16 if matmul_in_bf16 else jnp.float32
    img = jnp.asarray(norm_img_feats, feat_dtype)
    desc = jnp.asarray(norm_desc_feats, feat_dtype)
    text = jnp.asarray(norm_text_feats, feat_dtype)
    scal = jnp.stack([jnp.asarray(temperature, jnp.float32).reshape(()),
                      jnp.asarray(w_v, jnp.float32).reshape(()),
                      jnp.asarray(w_s, jnp.float32).reshape(())])

    tk = _pick_col_tile(n, col_tile)
    grid = (n // tk,)

    bytes_per = 2 if matmul_in_bf16 else 4
    cost = pl.CostEstimate(
        flops=4 * n * n * d,                 # two [n,d] x [d,n] matmuls
        transcendentals=4 * n * n + 8 * n,   # exp (row+col, both sims) + logs
        bytes_accessed=3 * n * d * bytes_per + 4,
    )

    out = pl.pallas_call(
        _clip_descriptor_kernel,
        out_shape=jax.ShapeDtypeStruct((1, 1), jnp.float32),
        grid=grid,
        in_specs=[
            pl.BlockSpec(memory_space=pltpu.MemorySpace.SMEM),   # (t, w_v, w_s)
            pl.BlockSpec((n, d), lambda k: (0, 0)),              # img (resident)
            pl.BlockSpec((n, d), lambda k: (0, 0)),              # desc (resident)
            pl.BlockSpec((tk, d), lambda k: (k, 0)),             # text tile k
        ],
        out_specs=pl.BlockSpec((1, 1), lambda k: (0, 0)),
        scratch_shapes=[
            pltpu.VMEM((n, 1), jnp.float32),   # m_v: running row max (vision)
            pltpu.VMEM((n, 1), jnp.float32),   # l_v: running row sum (vision)
            pltpu.VMEM((n, 1), jnp.float32),   # m_s: running row max (scene)
            pltpu.VMEM((n, 1), jnp.float32),   # l_s: running row sum (scene)
            pltpu.VMEM((1, 1), jnp.float32),   # acc: col-lse/diag partial
        ],
        compiler_params=pltpu.CompilerParams(
            dimension_semantics=("arbitrary",)),   # reduction axis
        cost_estimate=cost,
    )(scal, img, desc, text)
    return out[0, 0]


def _reference_loss(img, desc, text, t, lam, features="both"):
    hp = jax.lax.Precision.HIGHEST  # keep the reference at true f32 accuracy

    def nll(feats):
        sim = jnp.matmul(feats, text.T, precision=hp) / t
        diag = jnp.diag(sim)
        nll_i = jnp.mean(-diag + logsumexp(sim, axis=-1))
        nll_t = jnp.mean(-diag + logsumexp(sim.T, axis=-1))
        return (nll_i + nll_t) / 2.0

    if features == "both":
        return nll(img) * lam + nll(desc)
    if features == "img":
        return nll(img)
    return nll(desc)


if __name__ == "__main__":
    n, d = 8, 512  # n samples, CLIP feature dim

    key = jax.random.PRNGKey(0)
    k1, k2, k3 = jax.random.split(key, 3)

    def l2norm(x):
        return x / jnp.linalg.norm(x, axis=-1, keepdims=True)

    # The module receives already-normalized CLIP features; build them here.
    norm_img_feats = l2norm(jax.random.normal(k1, (n, d), jnp.float32))
    norm_desc_feats = l2norm(jax.random.normal(k2, (n, d), jnp.float32))
    norm_text_feats = l2norm(jax.random.normal(k3, (n, d), jnp.float32))

    # Deterministic parameter init (matches nn.Parameter defaults in __init__).
    temperature = jnp.float32(0.07)
    lambda_s = jnp.float32(1.0)

    for mode in ("both", "img", "text"):
        loss = clip_descriptor_loss(norm_img_feats, norm_desc_feats,
                                    norm_text_feats, temperature, lambda_s,
                                    features=mode)
        loss = jax.block_until_ready(loss)
        ref = _reference_loss(norm_img_feats, norm_desc_feats, norm_text_feats,
                              temperature, lambda_s, features=mode)
        assert jnp.allclose(loss, ref, rtol=1e-3, atol=1e-3), (mode, loss, ref)

    print("KERNEL_OK")
</pallas_src>

<mosaic_0001>
module attributes {stable_mosaic.version = 11 : i64} {
  func.func @_clip_descriptor_kernel(%arg0: i32, %arg1: memref<3xf32, #tpu.memory_space<smem>>, %arg2: memref<8x512xf32, #tpu.memory_space<vmem>>, %arg3: memref<8x512xf32, #tpu.memory_space<vmem>>, %arg4: memref<8x512xf32, #tpu.memory_space<vmem>>, %arg5: memref<1x1xf32, #tpu.memory_space<vmem>>, %arg6: memref<8x1xf32, #tpu.memory_space<vmem>>, %arg7: memref<8x1xf32, #tpu.memory_space<vmem>>, %arg8: memref<8x1xf32, #tpu.memory_space<vmem>>, %arg9: memref<8x1xf32, #tpu.memory_space<vmem>>, %arg10: memref<1x1xf32, #tpu.memory_space<vmem>>) attributes {dimension_semantics = [#tpu.dimension_semantics<arbitrary>], iteration_bounds = array<i64: 1>, scalar_prefetch = 0 : i64, scratch_operands = 5 : i64, tpu.core_type = #tpu.core_type<tc>, window_params = [{transform_indices = @transform_0, window_bounds = array<i64: 3>}, {pipeline_mode = #tpu.pipeline_mode<synchronous>, transform_indices = @transform_1, window_bounds = array<i64: 8, 512>}, {pipeline_mode = #tpu.pipeline_mode<synchronous>, transform_indices = @transform_2, window_bounds = array<i64: 8, 512>}, {transform_indices = @transform_3, window_bounds = array<i64: 8, 512>}, {pipeline_mode = #tpu.pipeline_mode<synchronous>, transform_indices = @transform_4, window_bounds = array<i64: 1, 1>}]} {
    %c0 = arith.constant 0 : index
    %0 = memref.load %arg1[%c0] : memref<3xf32, #tpu.memory_space<smem>>
    %c1 = arith.constant 1 : index
    %1 = memref.load %arg1[%c1] : memref<3xf32, #tpu.memory_space<smem>>
    %c2 = arith.constant 2 : index
    %2 = memref.load %arg1[%c2] : memref<3xf32, #tpu.memory_space<smem>>
    %cst = arith.constant 1.000000e+00 : f32
    %3 = arith.divf %cst, %0 : f32
    %c0_i32 = arith.constant 0 : i32
    %4 = arith.cmpi eq, %arg0, %c0_i32 : i32
    %5 = arith.extui %4 : i1 to i32
    %c0_i32_0 = arith.constant 0 : i32
    %6 = arith.cmpi ne, %5, %c0_i32_0 : i32
    scf.if %6 {
      %cst_54 = arith.constant 0xFF800000 : f32
      %111 = vector.broadcast %cst_54 : f32 to vector<8x1xf32>
      %c0_55 = arith.constant 0 : index
      %c0_56 = arith.constant 0 : index
      %112 = vector.load %arg6[%c0_55, %c0_56] : memref<8x1xf32, #tpu.memory_space<vmem>>, vector<8x1xf32>
      tpu.vector_store %arg6[%c0_55, %c0_56], %111 {strides = array<i32>} : memref<8x1xf32, #tpu.memory_space<vmem>>, vector<8x1xf32>,
      %cst_57 = arith.constant 0xFF800000 : f32
      %113 = vector.broadcast %cst_57 : f32 to vector<8x1xf32>
      %c0_58 = arith.constant 0 : index
      %c0_59 = arith.constant 0 : index
      %114 = vector.load %arg8[%c0_58, %c0_59] : memref<8x1xf32, #tpu.memory_space<vmem>>, vector<8x1xf32>
      tpu.vector_store %arg8[%c0_58, %c0_59], %113 {strides = array<i32>} : memref<8x1xf32, #tpu.memory_space<vmem>>, vector<8x1xf32>,
      %cst_60 = arith.constant 0.000000e+00 : f32
      %115 = vector.broadcast %cst_60 : f32 to vector<8x1xf32>
      %c0_61 = arith.constant 0 : index
      %c0_62 = arith.constant 0 : index
      %116 = vector.load %arg7[%c0_61, %c0_62] : memref<8x1xf32, #tpu.memory_space<vmem>>, vector<8x1xf32>
      tpu.vector_store %arg7[%c0_61, %c0_62], %115 {strides = array<i32>} : memref<8x1xf32, #tpu.memory_space<vmem>>, vector<8x1xf32>,
      %cst_63 = arith.constant 0.000000e+00 : f32
      %117 = vector.broadcast %cst_63 : f32 to vector<8x1xf32>
      %c0_64 = arith.constant 0 : index
      %c0_65 = arith.constant 0 : index
      %118 = vector.load %arg9[%c0_64, %c0_65] : memref<8x1xf32, #tpu.memory_space<vmem>>, vector<8x1xf32>
      tpu.vector_store %arg9[%c0_64, %c0_65], %117 {strides = array<i32>} : memref<8x1xf32, #tpu.memory_space<vmem>>, vector<8x1xf32>,
      %cst_66 = arith.constant 0.000000e+00 : f32
      %119 = vector.broadcast %cst_66 : f32 to vector<1x1xf32>
      %c0_67 = arith.constant 0 : index
      %c0_68 = arith.constant 0 : index
      %120 = vector.load %arg10[%c0_67, %c0_68] : memref<1x1xf32, #tpu.memory_space<vmem>>, vector<1x1xf32>
      tpu.vector_store %arg10[%c0_67, %c0_68], %119 {strides = array<i32>} : memref<1x1xf32, #tpu.memory_space<vmem>>, vector<1x1xf32>,
    } else {
    }
    %c0_1 = arith.constant 0 : index
    %c0_2 = arith.constant 0 : index
    %7 = vector.load %arg4[%c0_1, %c0_2] : memref<8x512xf32, #tpu.memory_space<vmem>>, vector<8x512xf32>
    %c0_3 = arith.constant 0 : index
    %c0_4 = arith.constant 0 : index
    %8 = vector.load %arg2[%c0_3, %c0_4] : memref<8x512xf32, #tpu.memory_space<vmem>>, vector<8x512xf32>
    %c0_5 = arith.constant 0 : index
    %c0_6 = arith.constant 0 : index
    %9 = vector.load %arg3[%c0_5, %c0_6] : memref<8x512xf32, #tpu.memory_space<vmem>>, vector<8x512xf32>
    %cst_7 = arith.constant dense<0.000000e+00> : vector<8x8xf32>
    %10 = tpu.matmul %8, %7, %cst_7 {dimension_numbers = #tpu.dot_dimension_numbers<[1], [1], [0], [0], [0, 0, 1, 0], [], []>} : vector<8x512xf32>, vector<8x512xf32>, vector<8x8xf32> -> vector<8x8xf32>
    %11 = vector.broadcast %3 : f32 to vector<8x8xf32>
    %12 = arith.mulf %10, %11 : vector<8x8xf32>
    %cst_8 = arith.constant dense<0.000000e+00> : vector<8x8xf32>
    %13 = tpu.matmul %9, %7, %cst_8 {dimension_numbers = #tpu.dot_dimension_numbers<[1], [1], [0], [0], [0, 0, 1, 0], [], []>} : vector<8x512xf32>, vector<8x512xf32>, vector<8x8xf32> -> vector<8x8xf32>
    %14 = vector.broadcast %3 : f32 to vector<8x8xf32>
    %15 = arith.mulf %13, %14 : vector<8x8xf32>
    %c0_9 = arith.constant 0 : index
    %c0_10 = arith.constant 0 : index
    %16 = vector.load %arg6[%c0_9, %c0_10] : memref<8x1xf32, #tpu.memory_space<vmem>>, vector<8x1xf32>
    %cst_11 = arith.constant dense<0xFF800000> : vector<8xf32>
    %17 = vector.multi_reduction <maximumf>, %12, %cst_11 [1] : vector<8x8xf32> to vector<8xf32>
    %18 = vector.shape_cast %17 : vector<8xf32> to vector<8x1xf32>
    %19 = arith.maximumf %16, %18 : vector<8x1xf32>
    %c0_12 = arith.constant 0 : index
    %c0_13 = arith.constant 0 : index
    %20 = vector.load %arg7[%c0_12, %c0_13] : memref<8x1xf32, #tpu.memory_space<vmem>>, vector<8x1xf32>
    %c0_14 = arith.constant 0 : index
    %c0_15 = arith.constant 0 : index
    %21 = vector.load %arg6[%c0_14, %c0_15] : memref<8x1xf32, #tpu.memory_space<vmem>>, vector<8x1xf32>
    %22 = arith.subf %21, %19 : vector<8x1xf32>
    %23 = math.exp %22 : vector<8x1xf32>
    %24 = arith.mulf %20, %23 : vector<8x1xf32>
    %25 = vector.broadcast %19 : vector<8x1xf32> to vector<8x8xf32>
    %26 = arith.subf %12, %25 : vector<8x8xf32>
    %27 = math.exp %26 : vector<8x8xf32>
    %cst_16 = arith.constant dense<0.000000e+00> : vector<8xf32>
    %28 = vector.multi_reduction <add>, %27, %cst_16 [1] : vector<8x8xf32> to vector<8xf32>
    %29 = vector.shape_cast %28 : vector<8xf32> to vector<8x1xf32>
    %30 = arith.addf %24, %29 : vector<8x1xf32>
    %c0_17 = arith.constant 0 : index
    %c0_18 = arith.constant 0 : index
    %31 = vector.load %arg7[%c0_17, %c0_18] : memref<8x1xf32, #tpu.memory_space<vmem>>, vector<8x1xf32>
    tpu.vector_store %arg7[%c0_17, %c0_18], %30 {strides = array<i32>} : memref<8x1xf32, #tpu.memory_space<vmem>>, vector<8x1xf32>,
    %c0_19 = arith.constant 0 : index
    %c0_20 = arith.constant 0 : index
    %32 = vector.load %arg6[%c0_19, %c0_20] : memref<8x1xf32, #tpu.memory_space<vmem>>, vector<8x1xf32>
    tpu.vector_store %arg6[%c0_19, %c0_20], %19 {strides = array<i32>} : memref<8x1xf32, #tpu.memory_space<vmem>>, vector<8x1xf32>,
    %c0_21 = arith.constant 0 : index
    %c0_22 = arith.constant 0 : index
    %33 = vector.load %arg8[%c0_21, %c0_22] : memref<8x1xf32, #tpu.memory_space<vmem>>, vector<8x1xf32>
    %cst_23 = arith.constant dense<0xFF800000> : vector<8xf32>
    %34 = vector.multi_reduction <maximumf>, %15, %cst_23 [1] : vector<8x8xf32> to vector<8xf32>
    %35 = vector.shape_cast %34 : vector<8xf32> to vector<8x1xf32>
    %36 = arith.maximumf %33, %35 : vector<8x1xf32>
    %c0_24 = arith.constant 0 : index
    %c0_25 = arith.constant 0 : index
    %37 = vector.load %arg9[%c0_24, %c0_25] : memref<8x1xf32, #tpu.memory_space<vmem>>, vector<8x1xf32>
    %c0_26 = arith.constant 0 : index
    %c0_27 = arith.constant 0 : index
    %38 = vector.load %arg8[%c0_26, %c0_27] : memref<8x1xf32, #tpu.memory_space<vmem>>, vector<8x1xf32>
    %39 = arith.subf %38, %36 : vector<8x1xf32>
    %40 = math.exp %39 : vector<8x1xf32>
    %41 = arith.mulf %37, %40 : vector<8x1xf32>
    %42 = vector.broadcast %36 : vector<8x1xf32> to vector<8x8xf32>
    %43 = arith.subf %15, %42 : vector<8x8xf32>
    %44 = math.exp %43 : vector<8x8xf32>
    %cst_28 = arith.constant dense<0.000000e+00> : vector<8xf32>
    %45 = vector.multi_reduction <add>, %44, %cst_28 [1] : vector<8x8xf32> to vector<8xf32>
    %46 = vector.shape_cast %45 : vector<8xf32> to vector<8x1xf32>
    %47 = arith.addf %41, %46 : vector<8x1xf32>
    %c0_29 = arith.constant 0 : index
    %c0_30 = arith.constant 0 : index
    %48 = vector.load %arg9[%c0_29, %c0_30] : memref<8x1xf32, #tpu.memory_space<vmem>>, vector<8x1xf32>
    tpu.vector_store %arg9[%c0_29, %c0_30], %47 {strides = array<i32>} : memref<8x1xf32, #tpu.memory_space<vmem>>, vector<8x1xf32>,
    %c0_31 = arith.constant 0 : index
    %c0_32 = arith.constant 0 : index
    %49 = vector.load %arg8[%c0_31, %c0_32] : memref<8x1xf32, #tpu.memory_space<vmem>>, vector<8x1xf32>
    tpu.vector_store %arg8[%c0_31, %c0_32], %36 {strides = array<i32>} : memref<8x1xf32, #tpu.memory_space<vmem>>, vector<8x1xf32>,
    %cst_33 = arith.constant dense<0xFF800000> : vector<8xf32>
    %50 = vector.multi_reduction <maximumf>, %12, %cst_33 [0] : vector<8x8xf32> to vector<8xf32>
    %51 = vector.shape_cast %50 : vector<8xf32> to vector<1x8xf32>
    %52 = vector.broadcast %51 : vector<1x8xf32> to vector<8x8xf32>
    %53 = arith.subf %12, %52 : vector<8x8xf32>
    %54 = math.exp %53 : vector<8x8xf32>
    %cst_34 = arith.constant dense<0.000000e+00> : vector<8xf32>
    %55 = vector.multi_reduction <add>, %54, %cst_34 [0] : vector<8x8xf32> to vector<8xf32>
    %56 = vector.shape_cast %55 : vector<8xf32> to vector<1x8xf32>
    %57 = math.log %56 : vector<1x8xf32>
    %58 = arith.addf %51, %57 : vector<1x8xf32>
    %cst_35 = arith.constant dense<0.000000e+00> : vector<1xf32>
    %59 = vector.multi_reduction <add>, %58, %cst_35 [1] : vector<1x8xf32> to vector<1xf32>
    %60 = vector.shape_cast %59 : vector<1xf32> to vector<1x1xf32>
    %cst_36 = arith.constant dense<0xFF800000> : vector<8xf32>
    %61 = vector.multi_reduction <maximumf>, %15, %cst_36 [0] : vector<8x8xf32> to vector<8xf32>
    %62 = vector.shape_cast %61 : vector<8xf32> to vector<1x8xf32>
    %63 = vector.broadcast %62 : vector<1x8xf32> to vector<8x8xf32>
    %64 = arith.subf %15, %63 : vector<8x8xf32>
    %65 = math.exp %64 : vector<8x8xf32>
    %cst_37 = arith.constant dense<0.000000e+00> : vector<8xf32>
    %66 = vector.multi_reduction <add>, %65, %cst_37 [0] : vector<8x8xf32> to vector<8xf32>
    %67 = vector.shape_cast %66 : vector<8xf32> to vector<1x8xf32>
    %68 = math.log %67 : vector<1x8xf32>
    %69 = arith.addf %62, %68 : vector<1x8xf32>
    %cst_38 = arith.constant dense<0.000000e+00> : vector<1xf32>
    %70 = vector.multi_reduction <add>, %69, %cst_38 [1] : vector<1x8xf32> to vector<1xf32>
    %71 = vector.shape_cast %70 : vector<1xf32> to vector<1x1xf32>
    %c8_i32 = arith.constant 8 : i32
    %72 = arith.muli %arg0, %c8_i32 : i32
    %73 = tpu.assume_multiple %72, 8 : i32
    %74 = arith.index_cast %73 : i32 to index
    %c0_39 = arith.constant 0 : index
    %75 = vector.load %arg2[%74, %c0_39] : memref<8x512xf32, #tpu.memory_space<vmem>>, vector<8x512xf32>
    %76 = arith.index_cast %73 : i32 to index
    %c0_40 = arith.constant 0 : index
    %77 = vector.load %arg3[%76, %c0_40] : memref<8x512xf32, #tpu.memory_space<vmem>>, vector<8x512xf32>
    %78 = arith.mulf %75, %7 : vector<8x512xf32>
    %cst_41 = arith.constant dense<0.000000e+00> : vector<8xf32>
    %79 = vector.multi_reduction <add>, %78, %cst_41 [1] : vector<8x512xf32> to vector<8xf32>
    %80 = vector.shape_cast %79 : vector<8xf32> to vector<8x1xf32>
    %cst_42 = arith.constant dense<0.000000e+00> : vector<1xf32>
    %81 = vector.multi_reduction <add>, %80, %cst_42 [0] : vector<8x1xf32> to vector<1xf32>
    %82 = vector.shape_cast %81 : vector<1xf32> to vector<1x1xf32>
    %83 = vector.broadcast %3 : f32 to vector<1x1xf32>
    %84 = arith.mulf %82, %83 : vector<1x1xf32>
    %85 = arith.mulf %77, %7 : vector<8x512xf32>
    %cst_43 = arith.constant dense<0.000000e+00> : vector<8xf32>
    %86 = vector.multi_reduction <add>, %85, %cst_43 [1] : vector<8x512xf32> to vector<8xf32>
    %87 = vector.shape_cast %86 : vector<8xf32> to vector<8x1xf32>
    %cst_44 = arith.constant dense<0.000000e+00> : vector<1xf32>
    %88 = vector.multi_reduction <add>, %87, %cst_44 [0] : vector<8x1xf32> to vector<1xf32>
    %89 = vector.shape_cast %88 : vector<1xf32> to vector<1x1xf32>
    %90 = vector.broadcast %3 : f32 to vector<1x1xf32>
    %91 = arith.mulf %89, %90 : vector<1x1xf32>
    %c0_45 = arith.constant 0 : index
    %c0_46 = arith.constant 0 : index
    %92 = vector.load %arg10[%c0_45, %c0_46] : memref<1x1xf32, #tpu.memory_space<vmem>>, vector<1x1xf32>
    %cst_47 = arith.constant 5.000000e-01 : f32
    %93 = vector.broadcast %cst_47 : f32 to vector<1x1xf32>
    %94 = arith.mulf %93, %60 : vector<1x1xf32>
    %95 = arith.subf %94, %84 : vector<1x1xf32>
    %96 = vector.broadcast %1 : f32 to vector<1x1xf32>
    %97 = arith.mulf %96, %95 : vector<1x1xf32>
    %cst_48 = arith.constant 5.000000e-01 : f32
    %98 = vector.broadcast %cst_48 : f32 to vector<1x1xf32>
    %99 = arith.mulf %98, %71 : vector<1x1xf32>
    %100 = arith.subf %99, %91 : vector<1x1xf32>
    %101 = vector.broadcast %2 : f32 to vector<1x1xf32>
    %102 = arith.mulf %101, %100 : vector<1x1xf32>
    %103 = arith.addf %97, %102 : vector<1x1xf32>
    %cst_49 = arith.constant 1.250000e-01 : f32
    %104 = vector.broadcast %cst_49 : f32 to vector<1x1xf32>
    %105 = arith.mulf %103, %104 : vector<1x1xf32>
    %106 = arith.addf %92, %105 : vector<1x1xf32>
    %c0_50 = arith.constant 0 : index
    %c0_51 = arith.constant 0 : index
    %107 = vector.load %arg10[%c0_50, %c0_51] : memref<1x1xf32, #tpu.memory_space<vmem>>, vector<1x1xf32>
    tpu.vector_store %arg10[%c0_50, %c0_51], %106 {strides = array<i32>} : memref<1x1xf32, #tpu.memory_space<vmem>>, vector<1x1xf32>,
    %c0_i32_52 = arith.constant 0 : i32
    %108 = arith.cmpi eq, %arg0, %c0_i32_52 : i32
    %109 = arith.extui %108 : i1 to i32
    %c0_i32_53 = arith.constant 0 : i32
    %110 = arith.cmpi ne, %109, %c0_i32_53 : i32
    scf.if %110 {
      %c0_54 = arith.constant 0 : index
      %c0_55 = arith.constant 0 : index
      %111 = vector.load %arg6[%c0_54, %c0_55] : memref<8x1xf32, #tpu.memory_space<vmem>>, vector<8x1xf32>
      %c0_56 = arith.constant 0 : index
      %c0_57 = arith.constant 0 : index
      %112 = vector.load %arg7[%c0_56, %c0_57] : memref<8x1xf32, #tpu.memory_space<vmem>>, vector<8x1xf32>
      %113 = math.log %112 : vector<8x1xf32>
      %114 = arith.addf %111, %113 : vector<8x1xf32>
      %c0_58 = arith.constant 0 : index
      %c0_59 = arith.constant 0 : index
      %115 = vector.load %arg8[%c0_58, %c0_59] : memref<8x1xf32, #tpu.memory_space<vmem>>, vector<8x1xf32>
      %c0_60 = arith.constant 0 : index
      %c0_61 = arith.constant 0 : index
      %116 = vector.load %arg9[%c0_60, %c0_61] : memref<8x1xf32, #tpu.memory_space<vmem>>, vector<8x1xf32>
      %117 = math.log %116 : vector<8x1xf32>
      %118 = arith.addf %115, %117 : vector<8x1xf32>
      %cst_62 = arith.constant dense<0.000000e+00> : vector<1xf32>
      %119 = vector.multi_reduction <add>, %114, %cst_62 [0] : vector<8x1xf32> to vector<1xf32>
      %120 = vector.shape_cast %119 : vector<1xf32> to vector<1x1xf32>
      %cst_63 = arith.constant dense<0.000000e+00> : vector<1xf32>
      %121 = vector.multi_reduction <add>, %118, %cst_63 [0] : vector<8x1xf32> to vector<1xf32>
      %122 = vector.shape_cast %121 : vector<1xf32> to vector<1x1xf32>
      %c0_64 = arith.constant 0 : index
      %c0_65 = arith.constant 0 : index
      %123 = vector.load %arg10[%c0_64, %c0_65] : memref<1x1xf32, #tpu.memory_space<vmem>>, vector<1x1xf32>
      %cst_66 = arith.constant 5.000000e-01 : f32
      %124 = arith.mulf %cst_66, %1 : f32
      %125 = vector.broadcast %124 : f32 to vector<1x1xf32>
      %126 = arith.mulf %125, %120 : vector<1x1xf32>
      %cst_67 = arith.constant 5.000000e-01 : f32
      %127 = arith.mulf %cst_67, %2 : f32
      %128 = vector.broadcast %127 : f32 to vector<1x1xf32>
      %129 = arith.mulf %128, %122 : vector<1x1xf32>
      %130 = arith.addf %126, %129 : vector<1x1xf32>
      %cst_68 = arith.constant 1.250000e-01 : f32
      %131 = vector.broadcast %cst_68 : f32 to vector<1x1xf32>
      %132 = arith.mulf %130, %131 : vector<1x1xf32>
      %133 = arith.addf %123, %132 : vector<1x1xf32>
      %c0_69 = arith.constant 0 : index
      %c0_70 = arith.constant 0 : index
      %134 = vector.load %arg5[%c0_69, %c0_70] : memref<1x1xf32, #tpu.memory_space<vmem>>, vector<1x1xf32>
      tpu.vector_store %arg5[%c0_69, %c0_70], %133 {strides = array<i32>} : memref<1x1xf32, #tpu.memory_space<vmem>>, vector<1x1xf32>,
    } else {
    }
    return
  }
  func.func @transform_0(%arg0: i32) -> i32 {
    %c0_i32 = arith.constant 0 : i32
    %c0_i32_0 = arith.constant 0 : i32
    return %c0_i32 : i32
  }
  func.func @transform_1(%arg0: i32) -> (i32, i32) {
    %c0_i32 = arith.constant 0 : i32
    %c0_i32_0 = arith.constant 0 : i32
    %c0_i32_1 = arith.constant 0 : i32
    return %c0_i32, %c0_i32_0 : i32, i32
  }
  func.func @transform_2(%arg0: i32) -> (i32, i32) {
    %c0_i32 = arith.constant 0 : i32
    %c0_i32_0 = arith.constant 0 : i32
    %c0_i32_1 = arith.constant 0 : i32
    return %c0_i32, %c0_i32_0 : i32, i32
  }
  func.func @transform_3(%arg0: i32) -> (i32, i32) {
    %c0_i32 = arith.constant 0 : i32
    %c0_i32_0 = arith.constant 0 : i32
    return %arg0, %c0_i32 : i32, i32
  }
  func.func @transform_4(%arg0: i32) -> (i32, i32) {
    %c0_i32 = arith.constant 0 : i32
    %c0_i32_0 = arith.constant 0 : i32
    %c0_i32_1 = arith.constant 0 : i32
    return %c0_i32, %c0_i32_0 : i32, i32
  }
}

</mosaic_0001>

<llo_original>
// kernel: tpu_custom_call.1
$region0: #{tpu_custom_call.1}
  #allocation0 [shape = 'u32[]', space=smem, size = 0x4, offset = 0x4, fixed_abs, tag = 'smem constant byte address 0x4 - core index']
  #allocation1 [shape = 'u32[144,128]{1,0:T(1,128)}', space=vmem, size = 0x12000, scoped, tag = 'internal scratch']
  #allocation2 [shape = 'f32[8,1]{1,0:T(8,128)}', space=vmem, size = 0x1000, scoped, tag = 'scratch operand']
  #allocation3 [shape = 'f32[8,1]{1,0:T(8,128)}', space=vmem, size = 0x1000, scoped, tag = 'scratch operand']
  #allocation4 [shape = 'f32[8,1]{1,0:T(8,128)}', space=vmem, size = 0x1000, scoped, tag = 'scratch operand']
  #allocation5 [shape = 'f32[8,1]{1,0:T(8,128)}', space=vmem, size = 0x1000, scoped, tag = 'scratch operand']
  #allocation6 [shape = 'f32[1,1]{1,0:T(1,128)}', space=vmem, size = 0x200, scoped, tag = 'scratch operand']
  %s0 = inlined_call_operand.hbm [shape: f32[3], index: 0, kind: input, shape index: {}]
  %s1 = inlined_call_operand.hbm [shape: f32[8,512], index: 1, kind: input, shape index: {}]
  %s2 = inlined_call_operand.hbm [shape: f32[8,512], index: 2, kind: input, shape index: {}]
  %s3 = inlined_call_operand.hbm [shape: f32[8,512], index: 3, kind: input, shape index: {}]
  %s4 = inlined_call_operand.hbm [shape: f32[1,1], index: 4, kind: output, shape index: {}]
  %s5 = sld [smem:[#allocation0]]
  $region50: #{tpu_custom_call.1} parent=0
    _
  %s7 = ssub.s32 1, %s5
  %s8 = scalar_select 0, %s7, %s5
  $region1: #{tpu_custom_call.1} parent=0
    #allocation7 [shape = 'u8[512]{0}', space=smem, size = 0x200, scoped, tag = 'input window, operand 0, single buffered']
    #allocation8 [shape = 's32[1]{0}', space=sflag, size = 0x4, scoped, tag = 'scoped memory for tpu_custom_call.1']
    #allocation9 [shape = 's32[1]{0}', space=sflag, size = 0x4, scoped, tag = 'scoped memory for tpu_custom_call.1']
    #allocation10 [shape = 's32[1]{0}', space=sflag, size = 0x4, scoped, tag = 'scoped memory for tpu_custom_call.1']
    #allocation11 [shape = 'u8[16384]{0}', space=vmem, size = 0x4000, scoped, tag = 'input window, operand 1, single buffered']
    #allocation12 [shape = 'u8[16384]{0}', space=vmem, size = 0x4000, scoped, tag = 'input window, operand 2, single buffered']
    #allocation13 [shape = 's32[1]{0}', space=sflag, size = 0x4, scoped, tag = 'scoped memory for tpu_custom_call.1']
    #allocation14 [shape = 'u8[16384]{0}', space=vmem, size = 0x4000, scoped, tag = 'input window, operand 3, single buffered']
    #allocation15 [shape = 'u8[512]{0}', space=vmem, size = 0x400, scoped, tag = 'output window, operand 0, single buffered']
    %9 = vsyncpa [#allocation10], 0
    %10 = vsyncpa [#allocation8], 0
    %11 = vsyncpa [#allocation13], 0
    %12 = vsyncpa [#allocation9], 0
    // Predicated region
    $region2: #{tpu_custom_call.1} parent=1 // pred_check
      _
    $region3: #{tpu_custom_call.1} parent=1 // pred_check_branch
      %14 = sbr.rel (0) target = $region5
    $region4: #{tpu_custom_call.1} parent=1 // pred_region
      %s16 = ssub.s32 16, 16
      %17 = vsyncadd [#allocation10], %s16
      %20 = dma.hbm_to_smem %s0, 16, [#allocation7], [#allocation10]
    $region5: #{tpu_custom_call.1} parent=1 // pred_fallthru
      _
    // Predicated region
    $region6: #{tpu_custom_call.1} parent=1 // pred_check
      _
    $region7: #{tpu_custom_call.1} parent=1 // pred_check_branch
      %22 = sbr.rel (0) target = $region9
    $region8: #{tpu_custom_call.1} parent=1 // pred_region
      %s24 = ssub.s32 512, 512
      %25 = vsyncadd [#allocation8], %s24
      %s27 = sshll.u32 [#allocation11], 4
      %s28 = int_to_ptr.vmem [resolvable:$true] %s27
      %30 = dma.hbm_to_vmem [thread:$0]  %s1, 512, %s28, [#allocation8]
    $region9: #{tpu_custom_call.1} parent=1 // pred_fallthru
      _
    // Predicated region
    $region10: #{tpu_custom_call.1} parent=1 // pred_check
      _
    $region11: #{tpu_custom_call.1} parent=1 // pred_check_branch
      %32 = sbr.rel (0) target = $region13
    $region12: #{tpu_custom_call.1} parent=1 // pred_region
      %s34 = ssub.s32 512, 512
      %35 = vsyncadd [#allocation13], %s34
      %s37 = sshll.u32 [#allocation12], 4
      %s38 = int_to_ptr.vmem [resolvable:$true] %s37
      %40 = dma.hbm_to_vmem [thread:$0]  %s2, 512, %s38, [#allocation13]
    $region13: #{tpu_custom_call.1} parent=1 // pred_fallthru
      _
    // Predicated region
    $region14: #{tpu_custom_call.1} parent=1 // pred_check
      _
    $region15: #{tpu_custom_call.1} parent=1 // pred_check_branch
      %42 = sbr.rel (0) target = $region17
    $region16: #{tpu_custom_call.1} parent=1 // pred_region
      %s44 = ssub.s32 512, 512
      %45 = vsyncadd [#allocation13], %s44
      %s47 = sshll.u32 [#allocation14], 4
      %s48 = int_to_ptr.vmem [resolvable:$true] %s47
      %50 = dma.hbm_to_vmem [thread:$0]  %s3, 512, %s48, [#allocation13]
    $region17: #{tpu_custom_call.1} parent=1 // pred_fallthru
      _
    // Predicated region
    $region18: #{tpu_custom_call.1} parent=1 // pred_check
      _
    $region19: #{tpu_custom_call.1} parent=1 // pred_check_branch
      %52 = sbr.rel (0) target = $region21
    $region20: #{tpu_custom_call.1} parent=1 // pred_region
      %53 = dma.done [#allocation10], 16
    $region21: #{tpu_custom_call.1} parent=1 // pred_fallthru
      _
    // Predicated region
    $region22: #{tpu_custom_call.1} parent=1 // pred_check
      _
    $region23: #{tpu_custom_call.1} parent=1 // pred_check_branch
      %55 = sbr.rel (0) target = $region25
    $region24: #{tpu_custom_call.1} parent=1 // pred_region
      %56 = dma.done [#allocation8], 512
    $region25: #{tpu_custom_call.1} parent=1 // pred_fallthru
      _
    // Predicated region
    $region26: #{tpu_custom_call.1} parent=1 // pred_check
      _
    $region27: #{tpu_custom_call.1} parent=1 // pred_check_branch
      %58 = sbr.rel (0) target = $region29
    $region28: #{tpu_custom_call.1} parent=1 // pred_region
      %59 = dma.done [#allocation13], 512
    $region29: #{tpu_custom_call.1} parent=1 // pred_fallthru
      _
    // Predicated region
    $region30: #{tpu_custom_call.1} parent=1 // pred_check
      _
    $region31: #{tpu_custom_call.1} parent=1 // pred_check_branch
      %61 = sbr.rel (0) target = $region33
    $region32: #{tpu_custom_call.1} parent=1 // pred_region
      %62 = dma.done [#allocation13], 512
    $region33: #{tpu_custom_call.1} parent=1 // pred_fallthru
      _
    %63 = sfence
    %s64 = sld [smem:[#allocation7]]
    %s65 = sld [smem:[#allocation7 + $0x1]]
    %s66 = sld [smem:[#allocation7 + $0x2]]
    %v67 = vstv %s64
    %v68 = vrcp.pop %v67
    %s69 = vtos %v68
    %p70 = scmp.eq.s32.totalorder 0, 0
    // Predicated region
    $region34: #{tpu_custom_call.1} parent=1 // pred_check
      %p71 = pneg %p70
    $region35: #{tpu_custom_call.1} parent=1 // pred_check_branch
      %73 = sbr.rel (%p71) target = $region37
    $region36: #{tpu_custom_call.1} parent=1 // pred_region
      %vm74 = vcmask 7168
      %75 = vst.msk [vmem:[#allocation2] sm:$0xff] %vm74, -inf
      %76 = vst.msk [vmem:[#allocation4] sm:$0xff] %vm74, -inf
      %77 = vst.msk [vmem:[#allocation3] sm:$0xff] %vm74, 0.0
      %78 = vst.msk [vmem:[#allocation5] sm:$0xff] %vm74, 0.0
      %vm79 = vcmask 0
      %80 = vst.msk [vmem:[#allocation6] sm:$0x1] %vm79, 0.0
    $region37: #{tpu_custom_call.1} parent=1 // pred_fallthru
      _
    %v81 = vld [vmem:[#allocation14] sm:$0xff]
    %v82 = vld [vmem:[#allocation14 + $0x8] sm:$0xff]
    %v83 = vld [vmem:[#allocation14 + $0x10] sm:$0xff]
    %v84 = vld [vmem:[#allocation14 + $0x18] sm:$0xff]
    %v85 = vld [vmem:[#allocation11] sm:$0xff]
    %v86 = vld [vmem:[#allocation11 + $0x8] sm:$0xff]
    %v87 = vld [vmem:[#allocation11 + $0x10] sm:$0xff]
    %v88 = vld [vmem:[#allocation11 + $0x18] sm:$0xff]
    %v89 = vld [vmem:[#allocation12] sm:$0xff]
    %v90 = vld [vmem:[#allocation12 + $0x8] sm:$0xff]
    %v91 = vld [vmem:[#allocation12 + $0x10] sm:$0xff]
    %v92 = vld [vmem:[#allocation12 + $0x18] sm:$0xff]
    %93 = vmatprep.subr.mxu0 0.0
    %94 = vmatpush1.xpose.msra.mxu0 0.0
    %95 = vmatprep.subr.mxu0 0.0
    %96 = vmatpush1.xpose.msra.mxu0 0.0
    %97 = vmatprep.subr.mxu0 0.0
    %98 = vmatpush1.xpose.msra.mxu0 0.0
    %99 = vmatprep.subr.mxu0 0.0
    %100 = vmatpush1.xpose.msra.mxu0 0.0
    %101 = vmatprep.subr.mxu0 0.0
    %102 = vmatpush1.xpose.msra.mxu0 0.0
    %103 = vmatprep.subr.mxu0 0.0
    %104 = vmatpush1.xpose.msra.mxu0 0.0
    %105 = vmatprep.subr.mxu0 0.0
    %106 = vmatpush1.xpose.msra.mxu0 0.0
    %107 = vmatprep.subr.mxu0 0.0
    %108 = vmatpush1.xpose.msra.mxu0 0.0
    %109 = vmatprep.subr.mxu0 0.0
    %110 = vmatpush1.xpose.msra.mxu0 0.0
    %111 = vmatprep.subr.mxu0 0.0
    %112 = vmatpush1.xpose.msra.mxu0 0.0
    %113 = vmatprep.subr.mxu0 0.0
    %114 = vmatpush1.xpose.msra.mxu0 0.0
    %115 = vmatprep.subr.mxu0 0.0
    %116 = vmatpush1.xpose.msra.mxu0 0.0
    %117 = vmatprep.subr.mxu0 0.0
    %118 = vmatpush1.xpose.msra.mxu0 0.0
    %119 = vmatprep.subr.mxu0 0.0
    %120 = vmatpush1.xpose.msra.mxu0 0.0
    %121 = vmatprep.subr.mxu0 0.0
    %122 = vmatpush1.xpose.msra.mxu0 0.0
    %123 = vmatprep.subr.mxu0 %v82
    %124 = vmatpush1.xpose.msra.mxu0 %v81
    %125 = vmatprep.subr.mxu0 0.0
    %126 = vmatpush2.xpose.msra.mxu0 0.0
    %127 = vmatprep.subr.mxu0 0.0
    %128 = vmatpush2.xpose.msra.mxu0 0.0
    %129 = vmatprep.subr.mxu0 0.0
    %130 = vmatpush2.xpose.msra.mxu0 0.0
    %131 = vmatprep.subr.mxu0 0.0
    %132 = vmatpush2.xpose.msra.mxu0 0.0
    %133 = vmatprep.subr.mxu0 0.0
    %134 = vmatpush2.xpose.msra.mxu0 0.0
    %135 = vmatprep.subr.mxu0 0.0
    %136 = vmatpush2.xpose.msra.mxu0 0.0
    %137 = vmatprep.subr.mxu0 0.0
    %138 = vmatpush2.xpose.msra.mxu0 0.0
    %139 = vmatprep.subr.mxu0 0.0
    %140 = vmatpush2.xpose.msra.mxu0 0.0
    %141 = vmatprep.subr.mxu0 0.0
    %142 = vmatpush2.xpose.msra.mxu0 0.0
    %143 = vmatprep.subr.mxu0 0.0
    %144 = vmatpush2.xpose.msra.mxu0 0.0
    %145 = vmatprep.subr.mxu0 0.0
    %146 = vmatpush2.xpose.msra.mxu0 0.0
    %147 = vmatprep.subr.mxu0 0.0
    %148 = vmatpush2.xpose.msra.mxu0 0.0
    %149 = vmatprep.subr.mxu0 0.0
    %150 = vmatpush2.xpose.msra.mxu0 0.0
    %151 = vmatprep.subr.mxu0 0.0
    %152 = vmatpush2.xpose.msra.mxu0 0.0
    %153 = vmatprep.subr.mxu0 0.0
    %154 = vmatpush2.xpose.msra.mxu0 0.0
    %155 = vmatprep.subr.mxu0 0.0
    %156 = vmatpush2.xpose.msra.mxu0 0.0
    %157 = vmatprep.mubr.f32.mxu0 %v86
    %158 = vmatmul.mubr.f32.gmra.mxu0 %v85
    %v159 = vpop.f32.mrf.mxu0
    %v160 = vadd.f32 0.0, %v159
    %v161 = vpop.f32.mrf.mxu0
    %162 = vdwg.mxu0
    %163 = vmatprep.subr.mxu0 0.0
    %164 = vmatpush1.xpose.msra.mxu0 0.0
    %165 = vmatprep.subr.mxu0 0.0
    %166 = vmatpush1.xpose.msra.mxu0 0.0
    %167 = vmatprep.subr.mxu0 0.0
    %168 = vmatpush1.xpose.msra.mxu0 0.0
    %169 = vmatprep.subr.mxu0 0.0
    %170 = vmatpush1.xpose.msra.mxu0 0.0
    %171 = vmatprep.subr.mxu0 0.0
    %172 = vmatpush1.xpose.msra.mxu0 0.0
    %173 = vmatprep.subr.mxu0 0.0
    %174 = vmatpush1.xpose.msra.mxu0 0.0
    %175 = vmatprep.subr.mxu0 0.0
    %176 = vmatpush1.xpose.msra.mxu0 0.0
    %177 = vmatprep.subr.mxu0 0.0
    %178 = vmatpush1.xpose.msra.mxu0 0.0
    %179 = vmatprep.subr.mxu0 0.0
    %180 = vmatpush1.xpose.msra.mxu0 0.0
    %181 = vmatprep.subr.mxu0 0.0
    %182 = vmatpush1.xpose.msra.mxu0 0.0
    %183 = vmatprep.subr.mxu0 0.0
    %184 = vmatpush1.xpose.msra.mxu0 0.0
    %185 = vmatprep.subr.mxu0 0.0
    %186 = vmatpush1.xpose.msra.mxu0 0.0
    %187 = vmatprep.subr.mxu0 0.0
    %188 = vmatpush1.xpose.msra.mxu0 0.0
    %189 = vmatprep.subr.mxu0 0.0
    %190 = vmatpush1.xpose.msra.mxu0 0.0
    %191 = vmatprep.subr.mxu0 0.0
    %192 = vmatpush1.xpose.msra.mxu0 0.0
    %193 = vmatprep.subr.mxu0 %v84
    %194 = vmatpush1.xpose.msra.mxu0 %v83
    %195 = vmatprep.subr.mxu0 0.0
    %196 = vmatpush2.xpose.msra.mxu0 0.0
    %197 = vmatprep.subr.mxu0 0.0
    %198 = vmatpush2.xpose.msra.mxu0 0.0
    %199 = vmatprep.subr.mxu0 0.0
    %200 = vmatpush2.xpose.msra.mxu0 0.0
    %201 = vmatprep.subr.mxu0 0.0
    %202 = vmatpush2.xpose.msra.mxu0 0.0
    %203 = vmatprep.subr.mxu0 0.0
    %204 = vmatpush2.xpose.msra.mxu0 0.0
    %205 = vmatprep.subr.mxu0 0.0
    %206 = vmatpush2.xpose.msra.mxu0 0.0
    %207 = vmatprep.subr.mxu0 0.0
    %208 = vmatpush2.xpose.msra.mxu0 0.0
    %209 = vmatprep.subr.mxu0 0.0
    %210 = vmatpush2.xpose.msra.mxu0 0.0
    %211 = vmatprep.subr.mxu0 0.0
    %212 = vmatpush2.xpose.msra.mxu0 0.0
    %213 = vmatprep.subr.mxu0 0.0
    %214 = vmatpush2.xpose.msra.mxu0 0.0
    %215 = vmatprep.subr.mxu0 0.0
    %216 = vmatpush2.xpose.msra.mxu0 0.0
    %217 = vmatprep.subr.mxu0 0.0
    %218 = vmatpush2.xpose.msra.mxu0 0.0
    %219 = vmatprep.subr.mxu0 0.0
    %220 = vmatpush2.xpose.msra.mxu0 0.0
    %221 = vmatprep.subr.mxu0 0.0
    %222 = vmatpush2.xpose.msra.mxu0 0.0
    %223 = vmatprep.subr.mxu0 0.0
    %224 = vmatpush2.xpose.msra.mxu0 0.0
    %225 = vmatprep.subr.mxu0 0.0
    %226 = vmatpush2.xpose.msra.mxu0 0.0
    %227 = vmatprep.mubr.f32.mxu0 %v88
    %228 = vmatmul.mubr.f32.gmra.mxu0 %v87
    %v229 = vpop.f32.mrf.mxu0
    %v230 = vadd.f32 %v160, %v229
    %v231 = vpop.f32.mrf.mxu0
    %232 = vdwg.mxu0
    %v233 = vstv %s69
    %v234 = vmul.f32 %v230, %v233
    %235 = vmatprep.subr.mxu0 0.0
    %236 = vmatpush1.xpose.msra.mxu0 0.0
    %237 = vmatprep.subr.mxu0 0.0
    %238 = vmatpush1.xpose.msra.mxu0 0.0
    %239 = vmatprep.subr.mxu0 0.0
    %240 = vmatpush1.xpose.msra.mxu0 0.0
    %241 = vmatprep.subr.mxu0 0.0
    %242 = vmatpush1.xpose.msra.mxu0 0.0
    %243 = vmatprep.subr.mxu0 0.0
    %244 = vmatpush1.xpose.msra.mxu0 0.0
    %245 = vmatprep.subr.mxu0 0.0
    %246 = vmatpush1.xpose.msra.mxu0 0.0
    %247 = vmatprep.subr.mxu0 0.0
    %248 = vmatpush1.xpose.msra.mxu0 0.0
    %249 = vmatprep.subr.mxu0 0.0
    %250 = vmatpush1.xpose.msra.mxu0 0.0
    %251 = vmatprep.subr.mxu0 0.0
    %252 = vmatpush1.xpose.msra.mxu0 0.0
    %253 = vmatprep.subr.mxu0 0.0
    %254 = vmatpush1.xpose.msra.mxu0 0.0
    %255 = vmatprep.subr.mxu0 0.0
    %256 = vmatpush1.xpose.msra.mxu0 0.0
    %257 = vmatprep.subr.mxu0 0.0
    %258 = vmatpush1.xpose.msra.mxu0 0.0
    %259 = vmatprep.subr.mxu0 0.0
    %260 = vmatpush1.xpose.msra.mxu0 0.0
    %261 = vmatprep.subr.mxu0 0.0
    %262 = vmatpush1.xpose.msra.mxu0 0.0
    %263 = vmatprep.subr.mxu0 0.0
    %264 = vmatpush1.xpose.msra.mxu0 0.0
    %265 = vmatprep.subr.mxu0 %v82
    %266 = vmatpush1.xpose.msra.mxu0 %v81
    %267 = vmatprep.subr.mxu0 0.0
    %268 = vmatpush2.xpose.msra.mxu0 0.0
    %269 = vmatprep.subr.mxu0 0.0
    %270 = vmatpush2.xpose.msra.mxu0 0.0
    %271 = vmatprep.subr.mxu0 0.0
    %272 = vmatpush2.xpose.msra.mxu0 0.0
    %273 = vmatprep.subr.mxu0 0.0
    %274 = vmatpush2.xpose.msra.mxu0 0.0
    %275 = vmatprep.subr.mxu0 0.0
    %276 = vmatpush2.xpose.msra.mxu0 0.0
    %277 = vmatprep.subr.mxu0 0.0
    %278 = vmatpush2.xpose.msra.mxu0 0.0
    %279 = vmatprep.subr.mxu0 0.0
    %280 = vmatpush2.xpose.msra.mxu0 0.0
    %281 = vmatprep.subr.mxu0 0.0
    %282 = vmatpush2.xpose.msra.mxu0 0.0
    %283 = vmatprep.subr.mxu0 0.0
    %284 = vmatpush2.xpose.msra.mxu0 0.0
    %285 = vmatprep.subr.mxu0 0.0
    %286 = vmatpush2.xpose.msra.mxu0 0.0
    %287 = vmatprep.subr.mxu0 0.0
    %288 = vmatpush2.xpose.msra.mxu0 0.0
    %289 = vmatprep.subr.mxu0 0.0
    %290 = vmatpush2.xpose.msra.mxu0 0.0
    %291 = vmatprep.subr.mxu0 0.0
    %292 = vmatpush2.xpose.msra.mxu0 0.0
    %293 = vmatprep.subr.mxu0 0.0
    %294 = vmatpush2.xpose.msra.mxu0 0.0
    %295 = vmatprep.subr.mxu0 0.0
    %296 = vmatpush2.xpose.msra.mxu0 0.0
    %297 = vmatprep.subr.mxu0 0.0
    %298 = vmatpush2.xpose.msra.mxu0 0.0
    %299 = vmatprep.mubr.f32.mxu0 %v90
    %300 = vmatmul.mubr.f32.gmra.mxu0 %v89
    %v301 = vpop.f32.mrf.mxu0
    %v302 = vadd.f32 0.0, %v301
    %v303 = vpop.f32.mrf.mxu0
    %304 = vdwg.mxu0
    %305 = vmatprep.subr.mxu0 0.0
    %306 = vmatpush1.xpose.msra.mxu0 0.0
    %307 = vmatprep.subr.mxu0 0.0
    %308 = vmatpush1.xpose.msra.mxu0 0.0
    %309 = vmatprep.subr.mxu0 0.0
    %310 = vmatpush1.xpose.msra.mxu0 0.0
    %311 = vmatprep.subr.mxu0 0.0
    %312 = vmatpush1.xpose.msra.mxu0 0.0
    %313 = vmatprep.subr.mxu0 0.0
    %314 = vmatpush1.xpose.msra.mxu0 0.0
    %315 = vmatprep.subr.mxu0 0.0
    %316 = vmatpush1.xpose.msra.mxu0 0.0
    %317 = vmatprep.subr.mxu0 0.0
    %318 = vmatpush1.xpose.msra.mxu0 0.0
    %319 = vmatprep.subr.mxu0 0.0
    %320 = vmatpush1.xpose.msra.mxu0 0.0
    %321 = vmatprep.subr.mxu0 0.0
    %322 = vmatpush1.xpose.msra.mxu0 0.0
    %323 = vmatprep.subr.mxu0 0.0
    %324 = vmatpush1.xpose.msra.mxu0 0.0
    %325 = vmatprep.subr.mxu0 0.0
    %326 = vmatpush1.xpose.msra.mxu0 0.0
    %327 = vmatprep.subr.mxu0 0.0
    %328 = vmatpush1.xpose.msra.mxu0 0.0
    %329 = vmatprep.subr.mxu0 0.0
    %330 = vmatpush1.xpose.msra.mxu0 0.0
    %331 = vmatprep.subr.mxu0 0.0
    %332 = vmatpush1.xpose.msra.mxu0 0.0
    %333 = vmatprep.subr.mxu0 0.0
    %334 = vmatpush1.xpose.msra.mxu0 0.0
    %335 = vmatprep.subr.mxu0 %v84
    %336 = vmatpush1.xpose.msra.mxu0 %v83
    %337 = vmatprep.subr.mxu0 0.0
    %338 = vmatpush2.xpose.msra.mxu0 0.0
    %339 = vmatprep.subr.mxu0 0.0
    %340 = vmatpush2.xpose.msra.mxu0 0.0
    %341 = vmatprep.subr.mxu0 0.0
    %342 = vmatpush2.xpose.msra.mxu0 0.0
    %343 = vmatprep.subr.mxu0 0.0
    %344 = vmatpush2.xpose.msra.mxu0 0.0
    %345 = vmatprep.subr.mxu0 0.0
    %346 = vmatpush2.xpose.msra.mxu0 0.0
    %347 = vmatprep.subr.mxu0 0.0
    %348 = vmatpush2.xpose.msra.mxu0 0.0
    %349 = vmatprep.subr.mxu0 0.0
    %350 = vmatpush2.xpose.msra.mxu0 0.0
    %351 = vmatprep.subr.mxu0 0.0
    %352 = vmatpush2.xpose.msra.mxu0 0.0
    %353 = vmatprep.subr.mxu0 0.0
    %354 = vmatpush2.xpose.msra.mxu0 0.0
    %355 = vmatprep.subr.mxu0 0.0
    %356 = vmatpush2.xpose.msra.mxu0 0.0
    %357 = vmatprep.subr.mxu0 0.0
    %358 = vmatpush2.xpose.msra.mxu0 0.0
    %359 = vmatprep.subr.mxu0 0.0
    %360 = vmatpush2.xpose.msra.mxu0 0.0
    %361 = vmatprep.subr.mxu0 0.0
    %362 = vmatpush2.xpose.msra.mxu0 0.0
    %363 = vmatprep.subr.mxu0 0.0
    %364 = vmatpush2.xpose.msra.mxu0 0.0
    %365 = vmatprep.subr.mxu0 0.0
    %366 = vmatpush2.xpose.msra.mxu0 0.0
    %367 = vmatprep.subr.mxu0 0.0
    %368 = vmatpush2.xpose.msra.mxu0 0.0
    %369 = vmatprep.mubr.f32.mxu0 %v92
    %370 = vmatmul.mubr.f32.gmra.mxu0 %v91
    %v371 = vpop.f32.mrf.mxu0
    %v372 = vadd.f32 %v302, %v371
    %v373 = vpop.f32.mrf.mxu0
    %374 = vdwg.mxu0
    %v375 = vmul.f32 %v372, %v233
    %v376 = vld [vmem:[#allocation2] sm:$0xff]
    %vm377 = vcmask 64512
    %v378 = vsel %vm377, %v234, -inf
    %379 = vmax.xlane.f32.xlu0 %v378
    %v380 = vpop.xlane.xlu0 %379
    %v381 = vmax.f32 %v376, %v380
    %v382 = vld [vmem:[#allocation3] sm:$0xff]
    %v383 = vsub.f32 %v376, %v381
    %v384 = vmul.f32 %v383, 1.442695
    %v385 = vpow.pop %v384
    %v386 = vmul.f32 %v382, %v385
    %388 = vset.pattern.permute.xlu0 0
    %389 = vperm.xlu0 %388, %v381
    %v390 = vpop.permute.xlu0 %389
    %v392 = vsub.f32 %v234, %v390
    %v393 = vmul.f32 %v392, 1.442695
    %v394 = vpow.pop %v393
    %v395 = vsel %vm377, %v394, 0.0
    %396 = vadd.xlane.f32.xlu0 %v395
    %v397 = vpop.xlane.xlu0 %396
    %v398 = vadd.f32 %v386, %v397
    %vm399 = vcmask 7168
    %400 = vst.msk [vmem:[#allocation3] sm:$0xff] %vm399, %v398
    %401 = vst.msk [vmem:[#allocation2] sm:$0xff] %vm399, %v381
    %v402 = vld [vmem:[#allocation4] sm:$0xff]
    %v403 = vsel %vm377, %v375, -inf
    %404 = vmax.xlane.f32.xlu0 %v403
    %v405 = vpop.xlane.xlu0 %404
    %v406 = vmax.f32 %v402, %v405
    %v407 = vld [vmem:[#allocation5] sm:$0xff]
    %v408 = vsub.f32 %v402, %v406
    %v409 = vmul.f32 %v408, 1.442695
    %v410 = vpow.pop %v409
    %v411 = vmul.f32 %v407, %v410
    %413 = vset.pattern.permute.xlu0 0
    %414 = vperm.xlu0 %413, %v406
    %v415 = vpop.permute.xlu0 %414
    %v417 = vsub.f32 %v375, %v415
    %v418 = vmul.f32 %v417, 1.442695
    %v419 = vpow.pop %v418
    %v420 = vsel %vm377, %v419, 0.0
    %421 = vadd.xlane.f32.xlu0 %v420
    %v422 = vpop.xlane.xlu0 %421
    %v423 = vadd.f32 %v411, %v422
    %424 = vst.msk [vmem:[#allocation5] sm:$0xff] %vm399, %v423
    %425 = vst.msk [vmem:[#allocation4] sm:$0xff] %vm399, %v406
    %v426 = vrot.slane %v378, 4
    %v427 = vmax.f32 %v378, %v426
    %v428 = vrot.slane %v427, 2
    %v429 = vmax.f32 %v427, %v428
    %v430 = vrot.slane %v429, 1
    %v431 = vmax.f32 %v429, %v430
    %v432 = vsub.f32 %v234, %v431
    %v433 = vmul.f32 %v432, 1.442695
    %v434 = vpow.pop %v433
    %v435 = vsel %vm377, %v434, 0.0
    %v436 = vrot.slane %v435, 4
    %v437 = vadd.f32 %v435, %v436
    %v438 = vrot.slane %v437, 2
    %v439 = vadd.f32 %v437, %v438
    %v440 = vrot.slane %v439, 1
    %v441 = vadd.f32 %v439, %v440
    %v442 = vlog2.pop %v441
    %v443 = vmul.f32 %v442, 0.6931472
    %v444 = vadd.f32 %v431, %v443
    %v445 = vsel %vm377, %v444, 0.0
    %446 = vadd.xlane.f32.xlu0 %v445
    %v447 = vpop.xlane.xlu0 %446
    %v448 = vrot.slane %v403, 4
    %v449 = vmax.f32 %v403, %v448
    %v450 = vrot.slane %v449, 2
    %v451 = vmax.f32 %v449, %v450
    %v452 = vrot.slane %v451, 1
    %v453 = vmax.f32 %v451, %v452
    %v454 = vsub.f32 %v375, %v453
    %v455 = vmul.f32 %v454, 1.442695
    %v456 = vpow.pop %v455
    %v457 = vsel %vm377, %v456, 0.0
    %v458 = vrot.slane %v457, 4
    %v459 = vadd.f32 %v457, %v458
    %v460 = vrot.slane %v459, 2
    %v461 = vadd.f32 %v459, %v460
    %v462 = vrot.slane %v461, 1
    %v463 = vadd.f32 %v461, %v462
    %v464 = vlog2.pop %v463
    %v465 = vmul.f32 %v464, 0.6931472
    %v466 = vadd.f32 %v453, %v465
    %v467 = vsel %vm377, %v466, 0.0
    %468 = vadd.xlane.f32.xlu0 %v467
    %v469 = vpop.xlane.xlu0 %468
    %s470 = smul.u32 0, 8
    %s471 = sshra.s32 %s470, 3
    %s472 = sand.u32 %s470, 7
    %s473 = smul.u32 %s471, 4
    %s474 = smul.addr %s473, 8
    %s475 = scalar_lea.vmem [#allocation11], %s474
    %v476 = vld [vmem:[%s475] sm:$0xff]
    %v477 = vld [vmem:[%s475 + $0x8] sm:$0xff]
    %v478 = vld [vmem:[%s475 + $0x10] sm:$0xff]
    %v479 = vld [vmem:[%s475 + $0x18] sm:$0xff]
    %s480 = smul.addr %s473, 8
    %s481 = scalar_lea.vmem [#allocation12], %s480
    %v482 = vld [vmem:[%s481] sm:$0xff]
    %v483 = vld [vmem:[%s481 + $0x8] sm:$0xff]
    %v484 = vld [vmem:[%s481 + $0x10] sm:$0xff]
    %v485 = vld [vmem:[%s481 + $0x18] sm:$0xff]
    %v486 = vmul.f32 %v476, %v81
    %v487 = vmul.f32 %v477, %v82
    %v488 = vmul.f32 %v478, %v83
    %v489 = vmul.f32 %v479, %v84
    %v490 = vadd.f32 %v486, %v487
    %v491 = vadd.f32 %v490, %v488
    %v492 = vadd.f32 %v491, %v489
    %493 = vadd.xlane.f32.xlu0 %v492
    %v494 = vpop.xlane.xlu0 %493
    %v495 = vrot.slane %v494, 4
    %v496 = vadd.f32 %v494, %v495
    %v497 = vrot.slane %v496, 2
    %v498 = vadd.f32 %v496, %v497
    %v499 = vrot.slane %v498, 1
    %v500 = vadd.f32 %v498, %v499
    %v501 = vmul.f32 %v500, %v233
    %v502 = vmul.f32 %v482, %v81
    %v503 = vmul.f32 %v483, %v82
    %v504 = vmul.f32 %v484, %v83
    %v505 = vmul.f32 %v485, %v84
    %v506 = vadd.f32 %v502, %v503
    %v507 = vadd.f32 %v506, %v504
    %v508 = vadd.f32 %v507, %v505
    %509 = vadd.xlane.f32.xlu0 %v508
    %v510 = vpop.xlane.xlu0 %509
    %v511 = vrot.slane %v510, 4
    %v512 = vadd.f32 %v510, %v511
    %v513 = vrot.slane %v512, 2
    %v514 = vadd.f32 %v512, %v513
    %v515 = vrot.slane %v514, 1
    %v516 = vadd.f32 %v514, %v515
    %v517 = vmul.f32 %v516, %v233
    %v518 = vld [vmem:[#allocation6] sm:$0x1]
    %v519 = vmul.f32 %v447, 0.5
    %v520 = vsub.f32 %v519, %v501
    %v521 = vstv %s65
    %v522 = vmul.f32 %v521, %v520
    %v523 = vmul.f32 %v469, 0.5
    %v524 = vsub.f32 %v523, %v517
    %v525 = vstv %s66
    %v526 = vmul.f32 %v525, %v524
    %v527 = vadd.f32 %v522, %v526
    %v528 = vmul.f32 %v527, 0.125
    %v529 = vadd.f32 %v518, %v528
    %vm530 = vcmask 0
    %531 = vst.msk [vmem:[#allocation6] sm:$0x1] %vm530, %v529
    // Predicated region
    $region38: #{tpu_custom_call.1} parent=1 // pred_check
      %p532 = pneg %p70
    $region39: #{tpu_custom_call.1} parent=1 // pred_check_branch
      %534 = sbr.rel (%p532) target = $region41
    $region40: #{tpu_custom_call.1} parent=1 // pred_region
      %v535 = vld [vmem:[#allocation2] sm:$0xff]
      %v536 = vld [vmem:[#allocation3] sm:$0xff]
      %v537 = vlog2.pop %v536
      %v538 = vmul.f32 %v537, 0.6931472
      %v539 = vadd.f32 %v535, %v538
      %v540 = vld [vmem:[#allocation4] sm:$0xff]
      %v541 = vld [vmem:[#allocation5] sm:$0xff]
      %v542 = vlog2.pop %v541
      %v543 = vmul.f32 %v542, 0.6931472
      %v544 = vadd.f32 %v540, %v543
      %v545 = vsel %vm399, %v539, 0.0
      %v546 = vrot.slane %v545, 4
      %v547 = vadd.f32 %v545, %v546
      %v548 = vrot.slane %v547, 2
      %v549 = vadd.f32 %v547, %v548
      %v550 = vrot.slane %v549, 1
      %v551 = vadd.f32 %v549, %v550
      %v552 = vsel %vm399, %v544, 0.0
      %v553 = vrot.slane %v552, 4
      %v554 = vadd.f32 %v552, %v553
      %v555 = vrot.slane %v554, 2
      %v556 = vadd.f32 %v554, %v555
      %v557 = vrot.slane %v556, 1
      %v558 = vadd.f32 %v556, %v557
      %v559 = vld [vmem:[#allocation6] sm:$0x1]
      %s560 = smul.f32 %s65, 0.5
      %v561 = vstv %s560
      %v562 = vmul.f32 %v561, %v551
      %s563 = smul.f32 %s66, 0.5
      %v564 = vstv %s563
      %v565 = vmul.f32 %v564, %v558
      %v566 = vadd.f32 %v562, %v565
      %v567 = vmul.f32 %v566, 0.125
      %v568 = vadd.f32 %v559, %v567
      %569 = vst.msk [vmem:[#allocation15] sm:$0x1] %vm530, %v568
    $region41: #{tpu_custom_call.1} parent=1 // pred_fallthru
      _
    // Predicated region
    $region42: #{tpu_custom_call.1} parent=1 // pred_check
      _
    $region43: #{tpu_custom_call.1} parent=1 // pred_check_branch
      %571 = sbr.rel (0) target = $region45
    $region44: #{tpu_custom_call.1} parent=1 // pred_region
      %s573 = ssub.s32 16, 16
      %574 = vsyncadd [#allocation9], %s573
      %s576 = sshll.u32 [#allocation15], 4
      %s577 = int_to_ptr.vmem [resolvable:$true] %s576
      %579 = dma.vmem_to_hbm [thread:$0]  %s577, 16, %s4, [#allocation9]
    $region45: #{tpu_custom_call.1} parent=1 // pred_fallthru
      _
    // Predicated region
    $region46: #{tpu_custom_call.1} parent=1 // pred_check
      _
    $region47: #{tpu_custom_call.1} parent=1 // pred_check_branch
      %581 = sbr.rel (0) target = $region49
    $region48: #{tpu_custom_call.1} parent=1 // pred_region
      %582 = dma.done [#allocation9], 16
    $region49: #{tpu_custom_call.1} parent=1 // pred_fallthru
      _
    %583 = vsyncpa [#allocation8], 1
    %584 = vsyncpa [#allocation13], 1
    %585 = vsyncpa [#allocation9], 1
    %586 = vsyncpa [#allocation10], 1

</llo_original>
